<compile_context>
chip_gen: v5e
topology: v5e:2x2
jax: 0.10.0
libtpu: 0.0.40
codegen_flags: <defaults>
</compile_context>

<pallas_src>
import jax
import jax.numpy as jnp
from jax.experimental import pallas as pl
from jax.experimental.pallas import tpu as pltpu


def _round_up(x, m):
    return (x + m - 1) // m * m


def _matmul_bn_relu_kernel(p_ref, w_ref, scale_ref, shift_ref, o_ref, acc_ref):
    """(TM, TK) x (TK, TN) matmul accumulated over the K grid axis, with a fused
    per-column scale/shift (BN + conv bias) + ReLU epilogue on the last K step."""
    k = pl.program_id(2)

    @pl.when(k == 0)
    def _init():
        acc_ref[...] = jnp.zeros_like(acc_ref)

    acc_ref[...] += jnp.dot(p_ref[...], w_ref[...],
                            preferred_element_type=jnp.float32)

    @pl.when(k == pl.num_programs(2) - 1)
    def _finalize():
        y = acc_ref[...] * scale_ref[...] + shift_ref[...]   # f32 epilogue
        o_ref[...] = jnp.maximum(y, 0.0).astype(o_ref.dtype)


def conv_block_forward(x_nchw, weight_oihw, conv_bias, gamma, beta,
                       running_mean, running_var, *, stride=1, padding=0,
                       eps=1e-5, compute_dtype=jnp.bfloat16,
                       tm=256, tn=128, tk=128):
    N, C_in, H, W = x_nchw.shape
    C_out, _, KH, KW = weight_oihw.shape
    H_out = (H + 2 * padding - KH) // stride + 1
    W_out = (W + 2 * padding - KW) // stride + 1

    # ---- Glue (plain JAX): layout conversion, padding, im2col, BN fold. ----
    # TODO(synk): for large activations, fold padding + im2col into the kernel
    # (row tiles with a KH-1 halo via index_map) instead of materializing the
    # padded / patch tensors in HBM; acceptable here for small inputs.
    x_nhwc = jnp.transpose(x_nchw, (0, 2, 3, 1)).astype(jnp.float32)
    x_pad = jnp.pad(x_nhwc, ((0, 0), (padding, padding), (padding, padding), (0, 0)))

    h_span = (H_out - 1) * stride + 1
    w_span = (W_out - 1) * stride + 1
    cols = []
    for kh in range(KH):                   # static, KH*KW slices built by XLA
        for kw in range(KW):
            cols.append(x_pad[:, kh:kh + h_span:stride, kw:kw + w_span:stride, :])
    patches = jnp.concatenate(cols, axis=-1)          # (N, H_out, W_out, KH*KW*C_in)
    M = N * H_out * W_out
    K_feat = KH * KW * C_in
    patches = patches.reshape(M, K_feat)

    # Weight -> (KH*KW*C_in, C_out), matching the (kh, kw, c_in) patch ordering.
    w_mat = jnp.transpose(weight_oihw, (2, 3, 1, 0)).astype(jnp.float32)
    w_mat = w_mat.reshape(K_feat, C_out)

    # Fold BN (eval-mode running stats) + conv bias into per-channel scale/shift.
    scale = (gamma / jnp.sqrt(running_var + eps)).astype(jnp.float32)
    shift = (beta + scale * (conv_bias - running_mean)).astype(jnp.float32)

    # ---- Pad to lane/tile-friendly shapes (zeros do not change the result). ----
    M_pad = _round_up(M, tm)
    K_pad = _round_up(K_feat, tk)
    C_pad = _round_up(C_out, tn)

    patches = jnp.pad(patches, ((0, M_pad - M), (0, K_pad - K_feat))).astype(compute_dtype)
    w_mat = jnp.pad(w_mat, ((0, K_pad - K_feat), (0, C_pad - C_out))).astype(compute_dtype)
    scale2 = jnp.pad(scale, (0, C_pad - C_out)).reshape(1, C_pad)
    shift2 = jnp.pad(shift, (0, C_pad - C_out)).reshape(1, C_pad)

    grid = (M_pad // tm, C_pad // tn, K_pad // tk)

    out = pl.pallas_call(
        _matmul_bn_relu_kernel,
        out_shape=jax.ShapeDtypeStruct((M_pad, C_pad), jnp.float32),
        grid=grid,
        in_specs=[
            pl.BlockSpec((tm, tk), lambda i, j, k: (i, k)),   # patches
            pl.BlockSpec((tk, tn), lambda i, j, k: (k, j)),   # weight (lane-dense)
            pl.BlockSpec((1, tn), lambda i, j, k: (0, j)),    # scale
            pl.BlockSpec((1, tn), lambda i, j, k: (0, j)),    # shift
        ],
        out_specs=pl.BlockSpec((tm, tn), lambda i, j, k: (i, j)),
        scratch_shapes=[pltpu.VMEM((tm, tn), jnp.float32)],
        compiler_params=pltpu.CompilerParams(
            dimension_semantics=("parallel", "parallel", "arbitrary"),
            vmem_limit_bytes=32 * 1024 * 1024,
        ),
    )(patches, w_mat, scale2, shift2)

    out = out[:M, :C_out].reshape(N, H_out, W_out, C_out)
    return jnp.transpose(out, (0, 3, 1, 2))   # back to NCHW


if __name__ == "__main__":
    # Shapes consistent with ConvBlock(4, 8, kernel_size=3, stride=1, padding=1)
    N, C_in, H, W = 2, 4, 16, 16
    C_out, K = 8, 3
    stride, padding = 1, 1

    key = jax.random.PRNGKey(0)
    k_x, k_w, k_b, k_g, k_be = jax.random.split(key, 5)

    x = jax.random.normal(k_x, (N, C_in, H, W), jnp.float32)
    weight = jax.random.normal(k_w, (C_out, C_in, K, K), jnp.float32) * 0.1
    conv_bias = jax.random.normal(k_b, (C_out,), jnp.float32) * 0.1
    gamma = 1.0 + 0.1 * jax.random.normal(k_g, (C_out,), jnp.float32)
    beta = 0.1 * jax.random.normal(k_be, (C_out,), jnp.float32)
    running_mean = jnp.zeros((C_out,), jnp.float32)
    running_var = jnp.ones((C_out,), jnp.float32)
    eps = 1e-5

    # Pure-JAX reference (eval-mode BN).
    ref = jax.lax.conv_general_dilated(
        x, weight, (stride, stride), [(padding, padding), (padding, padding)],
        dimension_numbers=("NCHW", "OIHW", "NCHW"))
    ref = ref + conv_bias[None, :, None, None]
    ref = (ref - running_mean[None, :, None, None]) / jnp.sqrt(
        running_var[None, :, None, None] + eps)
    ref = ref * gamma[None, :, None, None] + beta[None, :, None, None]
    ref = jnp.maximum(ref, 0.0)

    # f32 operands: tight correctness check.
    out_f32 = conv_block_forward(x, weight, conv_bias, gamma, beta,
                                 running_mean, running_var,
                                 stride=stride, padding=padding, eps=eps,
                                 compute_dtype=jnp.float32)
    out_f32 = jax.block_until_ready(out_f32)
    assert out_f32.shape == (N, C_out, H, W), out_f32.shape
    assert jnp.allclose(out_f32, ref, rtol=1e-4, atol=1e-4), \
        float(jnp.max(jnp.abs(out_f32 - ref)))

    # bf16 operands (v6e/v7x MXU path, f32 accumulate/epilogue): looser tolerance.
    out_bf16 = conv_block_forward(x, weight, conv_bias, gamma, beta,
                                  running_mean, running_var,
                                  stride=stride, padding=padding, eps=eps,
                                  compute_dtype=jnp.bfloat16)
    out_bf16 = jax.block_until_ready(out_bf16)
    assert out_bf16.shape == (N, C_out, H, W), out_bf16.shape
    assert jnp.allclose(out_bf16, ref, rtol=5e-2, atol=5e-2), \
        float(jnp.max(jnp.abs(out_bf16 - ref)))

    print("KERNEL_OK")
</pallas_src>

<mosaic_0001>
module attributes {stable_mosaic.version = 11 : i64} {
  func.func @_matmul_bn_relu_kernel(%arg0: i32, %arg1: i32, %arg2: i32, %arg3: memref<256x128xf32, #tpu.memory_space<vmem>>, %arg4: memref<128x128xf32, #tpu.memory_space<vmem>>, %arg5: memref<1x128xf32, #tpu.memory_space<vmem>>, %arg6: memref<1x128xf32, #tpu.memory_space<vmem>>, %arg7: memref<256x128xf32, #tpu.memory_space<vmem>>, %arg8: memref<256x128xf32, #tpu.memory_space<vmem>>) attributes {dimension_semantics = [#tpu.dimension_semantics<parallel>, #tpu.dimension_semantics<parallel>, #tpu.dimension_semantics<arbitrary>], iteration_bounds = array<i64: 2, 1, 1>, scalar_prefetch = 0 : i64, scratch_operands = 1 : i64, tpu.core_type = #tpu.core_type<tc>, window_params = [{transform_indices = @transform_0, window_bounds = array<i64: 256, 128>}, {transform_indices = @transform_1, window_bounds = array<i64: 128, 128>}, {transform_indices = @transform_2, window_bounds = array<i64: 1, 128>}, {transform_indices = @transform_3, window_bounds = array<i64: 1, 128>}, {transform_indices = @transform_4, window_bounds = array<i64: 256, 128>}]} {
    %c0_i32 = arith.constant 0 : i32
    %0 = arith.cmpi eq, %arg2, %c0_i32 : i32
    %1 = arith.extui %0 : i1 to i32
    %c0_i32_0 = arith.constant 0 : i32
    %2 = arith.cmpi ne, %1, %c0_i32_0 : i32
    scf.if %2 {
      %cst_10 = arith.constant 0.000000e+00 : f32
      %12 = vector.broadcast %cst_10 : f32 to vector<256x128xf32>
      %c0_11 = arith.constant 0 : index
      %c0_12 = arith.constant 0 : index
      %13 = vector.load %arg8[%c0_11, %c0_12] : memref<256x128xf32, #tpu.memory_space<vmem>>, vector<256x128xf32>
      tpu.vector_store %arg8[%c0_11, %c0_12], %12 {strides = array<i32>} : memref<256x128xf32, #tpu.memory_space<vmem>>, vector<256x128xf32>,
    } else {
    }
    %c0 = arith.constant 0 : index
    %c0_1 = arith.constant 0 : index
    %3 = vector.load %arg8[%c0, %c0_1] : memref<256x128xf32, #tpu.memory_space<vmem>>, vector<256x128xf32>
    %c0_2 = arith.constant 0 : index
    %c0_3 = arith.constant 0 : index
    %4 = vector.load %arg3[%c0_2, %c0_3] : memref<256x128xf32, #tpu.memory_space<vmem>>, vector<256x128xf32>
    %c0_4 = arith.constant 0 : index
    %c0_5 = arith.constant 0 : index
    %5 = vector.load %arg4[%c0_4, %c0_5] : memref<128x128xf32, #tpu.memory_space<vmem>>, vector<128x128xf32>
    %cst = arith.constant dense<0.000000e+00> : vector<256x128xf32>
    %6 = tpu.matmul %4, %5, %cst {dimension_numbers = #tpu.dot_dimension_numbers<[1], [0], [0], [1], [0, 0, 1, 1], [], []>} : vector<256x128xf32>, vector<128x128xf32>, vector<256x128xf32> -> vector<256x128xf32>
    %7 = arith.addf %3, %6 : vector<256x128xf32>
    %c0_6 = arith.constant 0 : index
    %c0_7 = arith.constant 0 : index
    %8 = vector.load %arg8[%c0_6, %c0_7] : memref<256x128xf32, #tpu.memory_space<vmem>>, vector<256x128xf32>
    tpu.vector_store %arg8[%c0_6, %c0_7], %7 {strides = array<i32>} : memref<256x128xf32, #tpu.memory_space<vmem>>, vector<256x128xf32>,
    %c0_i32_8 = arith.constant 0 : i32
    %9 = arith.cmpi eq, %arg2, %c0_i32_8 : i32
    %10 = arith.extui %9 : i1 to i32
    %c0_i32_9 = arith.constant 0 : i32
    %11 = arith.cmpi ne, %10, %c0_i32_9 : i32
    scf.if %11 {
      %c0_10 = arith.constant 0 : index
      %c0_11 = arith.constant 0 : index
      %12 = vector.load %arg8[%c0_10, %c0_11] : memref<256x128xf32, #tpu.memory_space<vmem>>, vector<256x128xf32>
      %c0_12 = arith.constant 0 : index
      %c0_13 = arith.constant 0 : index
      %13 = vector.load %arg5[%c0_12, %c0_13] : memref<1x128xf32, #tpu.memory_space<vmem>>, vector<1x128xf32>
      %14 = vector.broadcast %13 : vector<1x128xf32> to vector<256x128xf32>
      %15 = arith.mulf %12, %14 : vector<256x128xf32>
      %c0_14 = arith.constant 0 : index
      %c0_15 = arith.constant 0 : index
      %16 = vector.load %arg6[%c0_14, %c0_15] : memref<1x128xf32, #tpu.memory_space<vmem>>, vector<1x128xf32>
      %17 = vector.broadcast %16 : vector<1x128xf32> to vector<256x128xf32>
      %18 = arith.addf %15, %17 : vector<256x128xf32>
      %cst_16 = arith.constant 0.000000e+00 : f32
      %19 = vector.broadcast %cst_16 : f32 to vector<256x128xf32>
      %20 = arith.maximumf %18, %19 : vector<256x128xf32>
      %c0_17 = arith.constant 0 : index
      %c0_18 = arith.constant 0 : index
      %21 = vector.load %arg7[%c0_17, %c0_18] : memref<256x128xf32, #tpu.memory_space<vmem>>, vector<256x128xf32>
      tpu.vector_store %arg7[%c0_17, %c0_18], %20 {strides = array<i32>} : memref<256x128xf32, #tpu.memory_space<vmem>>, vector<256x128xf32>,
    } else {
    }
    return
  }
  func.func @transform_0(%arg0: i32, %arg1: i32, %arg2: i32) -> (i32, i32) {
    %c0_i32 = arith.constant 0 : i32
    return %arg0, %arg2 : i32, i32
  }
  func.func @transform_1(%arg0: i32, %arg1: i32, %arg2: i32) -> (i32, i32) {
    %c0_i32 = arith.constant 0 : i32
    return %arg2, %arg1 : i32, i32
  }
  func.func @transform_2(%arg0: i32, %arg1: i32, %arg2: i32) -> (i32, i32) {
    %c0_i32 = arith.constant 0 : i32
    %c0_i32_0 = arith.constant 0 : i32
    return %c0_i32, %arg1 : i32, i32
  }
  func.func @transform_3(%arg0: i32, %arg1: i32, %arg2: i32) -> (i32, i32) {
    %c0_i32 = arith.constant 0 : i32
    %c0_i32_0 = arith.constant 0 : i32
    return %c0_i32, %arg1 : i32, i32
  }
  func.func @transform_4(%arg0: i32, %arg1: i32, %arg2: i32) -> (i32, i32) {
    %c0_i32 = arith.constant 0 : i32
    return %arg0, %arg1 : i32, i32
  }
}

</mosaic_0001>

<llo_original>
// kernel: tpu_custom_call.1
$region0: #{tpu_custom_call.1}
  #allocation0 [shape = 'u32[]', space=smem, size = 0x4, offset = 0x4, fixed_abs, tag = 'smem constant byte address 0x4 - core index']
  #allocation1 [shape = 'u32[72,128]{1,0:T(1,128)}', space=vmem, size = 0x9000, scoped, tag = 'internal scratch']
  #allocation2 [shape = 'f32[256,128]{1,0:T(8,128)}', space=vmem, size = 0x20000, scoped, tag = 'scratch operand']
  %s0 = inlined_call_operand.hbm [shape: f32[512,128], index: 0, kind: input, shape index: {}]
  %s1 = inlined_call_operand.hbm [shape: f32[128,128], index: 1, kind: input, shape index: {}]
  %s2 = inlined_call_operand.vmem [shape: f32[1,128], index: 2, kind: input, shape index: {}]
  %s3 = inlined_call_operand.vmem [shape: f32[1,128], index: 3, kind: input, shape index: {}]
  %s4 = inlined_call_operand.hbm [shape: f32[512,128], index: 4, kind: output, shape index: {}]
  %s5 = sld [smem:[#allocation0]]
  $region65: #{tpu_custom_call.1} parent=0
    _
  %s7 = ssub.s32 1, %s5
  %s8 = scalar_select 0, %s7, %s5
  $region1: #{tpu_custom_call.1} parent=0
    #allocation3 [shape = 'u8[262144]{0}', space=vmem, size = 0x40000, scoped, tag = 'input window, operand 0']
    #allocation4 [shape = 's32[2]{0}', space=sflag, size = 0x8, scoped, tag = 'scoped memory for tpu_custom_call.1']
    #allocation5 [shape = 's32[2]{0}', space=sflag, size = 0x8, scoped, tag = 'scoped memory for tpu_custom_call.1']
    #allocation6 [shape = 'u8[65536]{0}', space=vmem, size = 0x10000, scoped, tag = 'input window, operand 1, single buffered']
    #allocation7 [shape = 's32[1]{0}', space=sflag, size = 0x4, scoped, tag = 'scoped memory for tpu_custom_call.1']
    #allocation8 [shape = 'u8[262144]{0}', space=vmem, size = 0x40000, scoped, tag = 'output window, operand 0']
    %9 = vsyncpa [#allocation4], 0
    %s10 = scalar_lea.sflag [#allocation4], 1
    %11 = vsyncpa %s10, 0
    %12 = vsyncpa [#allocation7], 0
    %13 = vsyncpa [#allocation5], 0
    %s14 = scalar_lea.sflag [#allocation5], 1
    %15 = vsyncpa %s14, 0
    loop: start=0, step=1, limit=4
    $region2: #{tpu_custom_call.1} parent=1 // loop_pre_header
      _
    $region3: #{tpu_custom_call.1} parent=1 // loop_header
      %s17 = sphi 0, %s21
      %p18 = scmp.ge.s32.totalorder %s17, 4
      %s24 = sphi 0, %s43
      %s25 = sphi 0, %s39
      %s26 = sphi 0, %s35
      %s27 = sphi 0, %s24
      %s28 = sphi 0, %s25
      %s29 = sphi 0, %s26
      %s30 = sphi 0, %s27
      %s31 = sphi 0, %s28
      %s32 = sphi 0, %s29
      %s48 = sphi 0, %s50
      %s51 = sphi 0, %s48
      %s52 = sphi 0, %s51
      %s68 = sphi 0, %s52
      %s76 = sphi 0, %s78
      %s79 = sphi 0, %s76
      %s80 = sphi 0, %s79
      %s96 = sphi 0, %s80
      %s102 = sphi 0, %s104
      %s105 = sphi 0, %s102
      %s106 = sphi 0, %s105
      %s122 = sphi 0, %s106
      %s128 = sphi 0, %s130
      %s131 = sphi 0, %s128
      %s132 = sphi 0, %s131
      %s148 = sphi 0, %s132
      %s156 = sphi 0, %s158
      %s159 = sphi 0, %s156
      %s160 = sphi 0, %s159
      %s176 = sphi 0, %s160
    $region4: #{tpu_custom_call.1} parent=1 // loop_header_branch
      %20 = sbr.rel (%p18) target = $region8
    $region5: #{tpu_custom_call.1} parent=1 // loop_body
      %s22 = ssub.s32 %s17, 1
      %s23 = ssub.s32 %s17, 2
      %s33 = sadd.s32 1, %s26
      %p34 = scmp.ge.s32.totalorder %s33, 1
      %s35 = scalar_select %p34, 0, %s33
      %s36 = sadd.s32 1, %s25
      %s37 = scalar_select %p34, %s36, %s25
      %p38 = scmp.ge.s32.totalorder %s37, 1
      %s39 = scalar_select %p38, 0, %s37
      %s40 = sadd.s32 1, %s24
      %s41 = scalar_select %p38, %s40, %s24
      %p42 = scmp.ge.s32.totalorder %s41, 2
      %s43 = scalar_select %p42, 0, %s41
      %s44 = ssub.s32 %s24, %s43
      %s45 = ssub.s32 %s26, %s35
      %s46 = sor.u32 %s44, %s45
      %p47 = scmp.eq.s32.totalorder %s46, 0
      %s49 = sadd.s32 %s48, 1
      %s50 = scalar_select %p47, %s48, %s49
      %p53 = pneg %p47
      %p54 = scmp.eq.s32.totalorder %s17, 1
      %p55 = por %p53, %p54
      %p56 = scmp.ne.s32.totalorder %s48, %s51
      %p57 = scmp.eq.s32.totalorder %s17, 0
      %p58 = por %p56, %p57
      %p59 = scmp.ne.s32.totalorder %s48, %s51
      %p60 = scmp.eq.s32.totalorder %s22, 1
      %p61 = por %p59, %p60
      %p62 = scmp.ne.s32.totalorder %s51, %s52
      %p63 = scmp.eq.s32.totalorder %s22, 0
      %p64 = por %p62, %p63
      %p65 = scmp.ne.s32.totalorder %s51, %s52
      %p66 = scmp.eq.s32.totalorder %s23, 1
      %p67 = por %p65, %p66
      %p69 = scmp.ne.s32.totalorder %s52, %s68
      %p70 = scmp.eq.s32.totalorder %s23, 0
      %p71 = por %p69, %p70
      %s72 = ssub.s32 %s26, %s35
      %s73 = ssub.s32 %s25, %s39
      %s74 = sor.u32 %s72, %s73
      %p75 = scmp.eq.s32.totalorder %s74, 0
      %s77 = sadd.s32 %s76, 1
      %s78 = scalar_select %p75, %s76, %s77
      %p81 = pneg %p75
      %p82 = scmp.eq.s32.totalorder %s17, 1
      %p83 = por %p81, %p82
      %p84 = scmp.ne.s32.totalorder %s76, %s79
      %p85 = scmp.eq.s32.totalorder %s17, 0
      %p86 = por %p84, %p85
      %p87 = scmp.ne.s32.totalorder %s76, %s79
      %p88 = scmp.eq.s32.totalorder %s22, 1
      %p89 = por %p87, %p88
      %p90 = scmp.ne.s32.totalorder %s79, %s80
      %p91 = scmp.eq.s32.totalorder %s22, 0
      %p92 = por %p90, %p91
      %p93 = scmp.ne.s32.totalorder %s79, %s80
      %p94 = scmp.eq.s32.totalorder %s23, 1
      %p95 = por %p93, %p94
      %p97 = scmp.ne.s32.totalorder %s80, %s96
      %p98 = scmp.eq.s32.totalorder %s23, 0
      %p99 = por %p97, %p98
      %s100 = ssub.s32 %s25, %s39
      %p101 = scmp.eq.s32.totalorder %s100, 0
      %s103 = sadd.s32 %s102, 1
      %s104 = scalar_select %p101, %s102, %s103
      %p107 = pneg %p101
      %p108 = scmp.eq.s32.totalorder %s17, 1
      %p109 = por %p107, %p108
      %p110 = scmp.ne.s32.totalorder %s102, %s105
      %p111 = scmp.eq.s32.totalorder %s17, 0
      %p112 = por %p110, %p111
      %p113 = scmp.ne.s32.totalorder %s102, %s105
      %p114 = scmp.eq.s32.totalorder %s22, 1
      %p115 = por %p113, %p114
      %p116 = scmp.ne.s32.totalorder %s105, %s106
      %p117 = scmp.eq.s32.totalorder %s22, 0
      %p118 = por %p116, %p117
      %p119 = scmp.ne.s32.totalorder %s105, %s106
      %p120 = scmp.eq.s32.totalorder %s23, 1
      %p121 = por %p119, %p120
      %p123 = scmp.ne.s32.totalorder %s106, %s122
      %p124 = scmp.eq.s32.totalorder %s23, 0
      %p125 = por %p123, %p124
      %s126 = ssub.s32 %s25, %s39
      %p127 = scmp.eq.s32.totalorder %s126, 0
      %s129 = sadd.s32 %s128, 1
      %s130 = scalar_select %p127, %s128, %s129
      %p133 = pneg %p127
      %p134 = scmp.eq.s32.totalorder %s17, 1
      %p135 = por %p133, %p134
      %p136 = scmp.ne.s32.totalorder %s128, %s131
      %p137 = scmp.eq.s32.totalorder %s17, 0
      %p138 = por %p136, %p137
      %p139 = scmp.ne.s32.totalorder %s128, %s131
      %p140 = scmp.eq.s32.totalorder %s22, 1
      %p141 = por %p139, %p140
      %p142 = scmp.ne.s32.totalorder %s131, %s132
      %p143 = scmp.eq.s32.totalorder %s22, 0
      %p144 = por %p142, %p143
      %p145 = scmp.ne.s32.totalorder %s131, %s132
      %p146 = scmp.eq.s32.totalorder %s23, 1
      %p147 = por %p145, %p146
      %p149 = scmp.ne.s32.totalorder %s132, %s148
      %p150 = scmp.eq.s32.totalorder %s23, 0
      %p151 = por %p149, %p150
      %s152 = ssub.s32 %s24, %s43
      %s153 = ssub.s32 %s25, %s39
      %s154 = sor.u32 %s152, %s153
      %p155 = scmp.eq.s32.totalorder %s154, 0
      %s157 = sadd.s32 %s156, 1
      %s158 = scalar_select %p155, %s156, %s157
      %p161 = pneg %p155
      %p162 = scmp.eq.s32.totalorder %s17, 1
      %p163 = por %p161, %p162
      %p164 = scmp.ne.s32.totalorder %s156, %s159
      %p165 = scmp.eq.s32.totalorder %s17, 0
      %p166 = por %p164, %p165
      %p167 = scmp.ne.s32.totalorder %s156, %s159
      %p168 = scmp.eq.s32.totalorder %s22, 1
      %p169 = por %p167, %p168
      %p170 = scmp.ne.s32.totalorder %s159, %s160
      %p171 = scmp.eq.s32.totalorder %s22, 0
      %p172 = por %p170, %p171
      %p173 = scmp.ne.s32.totalorder %s159, %s160
      %p174 = scmp.eq.s32.totalorder %s23, 1
      %p175 = por %p173, %p174
      %p177 = scmp.ne.s32.totalorder %s160, %s176
      %p178 = scmp.eq.s32.totalorder %s23, 0
      %p179 = por %p177, %p178
      %p180 = scmp.le.s32.totalorder 1, %s17
      %p181 = scmp.lt.s32.totalorder %s17, 3
      %p182 = pnand %p180, %p181
      %p183 = pneg %p182
      // Predicated region
      $region9: #{tpu_custom_call.1} parent=5 // pred_check
        _
      $region10: #{tpu_custom_call.1} parent=5 // pred_check_branch
        %185 = sbr.rel (%p182) target = $region12
      $region11: #{tpu_custom_call.1} parent=5 // pred_region
        %s186 = ssub.s32 %s17, 1
        // Predicated region
        $region13: #{tpu_custom_call.1} parent=11 // pred_check
          %p187 = pneg %p92
        $region14: #{tpu_custom_call.1} parent=11 // pred_check_branch
          %189 = sbr.rel (%p187) target = $region16
        $region15: #{tpu_custom_call.1} parent=11 // pred_region
          %s190 = smul.u32 16, %s29
          %192 = vsyncadd [#allocation7], 0
          %s193 = sadd.s32 %s28, %s190
          %s194 = smul.addr %s193, 8
          %s195 = scalar_lea.hbm %s1, %s194
          %s196 = sshll.u32 %s195, 4
          %s197 = int_to_ptr.hbm [resolvable:$true] %s196
          %s198 = sshll.u32 [#allocation6], 4
          %s199 = int_to_ptr.vmem [resolvable:$true] %s198
          %204 = dma.hbm_to_vmem [thread:$0]  %s197, 2048, %s199, [#allocation7], 128, 128, 8
        $region16: #{tpu_custom_call.1} parent=11 // pred_fallthru
          _
        // Predicated region
        $region17: #{tpu_custom_call.1} parent=11 // pred_check
          %p205 = pneg %p118
        $region18: #{tpu_custom_call.1} parent=11 // pred_check_branch
          %207 = sbr.rel (%p205) target = $region20
        $region19: #{tpu_custom_call.1} parent=11 // pred_region
          %p208 = scmp.lt.s32.totalorder %s28, 0
          %s209 = scalar_select %p208, %s28, 0
          %s210 = scalar_lea.vmem %s2, %s209
        $region20: #{tpu_custom_call.1} parent=11 // pred_fallthru
          _
        // Predicated region
        $region21: #{tpu_custom_call.1} parent=11 // pred_check
          %p211 = pneg %p144
        $region22: #{tpu_custom_call.1} parent=11 // pred_check_branch
          %213 = sbr.rel (%p211) target = $region24
        $region23: #{tpu_custom_call.1} parent=11 // pred_region
          %p214 = scmp.lt.s32.totalorder %s28, 0
          %s215 = scalar_select %p214, %s28, 0
          %s216 = scalar_lea.vmem %s3, %s215
        $region24: #{tpu_custom_call.1} parent=11 // pred_fallthru
          _
      $region12: #{tpu_custom_call.1} parent=5 // pred_fallthru
        _
      %p217 = scmp.lt.s32.totalorder %s17, 2
      // Predicated region
      $region25: #{tpu_custom_call.1} parent=5 // pred_check
        %p218 = pneg %p217
      $region26: #{tpu_custom_call.1} parent=5 // pred_check_branch
        %220 = sbr.rel (%p218) target = $region28
      $region27: #{tpu_custom_call.1} parent=5 // pred_region
        // Predicated region
        $region29: #{tpu_custom_call.1} parent=27 // pred_check
          %p221 = pneg %p58
        $region30: #{tpu_custom_call.1} parent=27 // pred_check_branch
          %223 = sbr.rel (%p221) target = $region32
        $region31: #{tpu_custom_call.1} parent=27 // pred_region
          %s224 = sand.u32 %s48, 1
          %s225 = scalar_lea.sflag [#allocation4], %s224
          %s226 = sand.u32 %s48, 1
          %s227 = smul.addr %s226, 256
          %s228 = scalar_lea.vmem [#allocation3], %s227
          %s229 = smul.u32 32, %s24
          %231 = vsyncadd %s225, 0
          %s232 = sadd.s32 %s26, %s229
          %s233 = smul.addr %s232, 8
          %s234 = scalar_lea.hbm %s0, %s233
          %s235 = sshll.u32 %s234, 4
          %s236 = int_to_ptr.hbm [resolvable:$true] %s235
          %s237 = sshll.u32 %s228, 4
          %s238 = int_to_ptr.vmem [resolvable:$true] %s237
          %243 = dma.hbm_to_vmem [thread:$0]  %s236, 4096, %s238, %s225, 128, 128, 8
        $region32: #{tpu_custom_call.1} parent=27 // pred_fallthru
          _
      $region28: #{tpu_custom_call.1} parent=5 // pred_fallthru
        _
      %p244 = scmp.le.s32.totalorder 1, %s17
      %p245 = scmp.lt.s32.totalorder %s17, 3
      %p246 = pnand %p244, %p245
      %p247 = pneg %p246
      // Predicated region
      $region33: #{tpu_custom_call.1} parent=5 // pred_check
        _
      $region34: #{tpu_custom_call.1} parent=5 // pred_check_branch
        %249 = sbr.rel (%p246) target = $region36
      $region35: #{tpu_custom_call.1} parent=5 // pred_region
        %s250 = ssub.s32 %s17, 1
        %s251 = sand.u32 %s51, 1
        %s252 = scalar_lea.sflag [#allocation4], %s251
        %s253 = sand.u32 %s51, 1
        %s254 = smul.addr %s253, 256
        %s255 = scalar_lea.vmem [#allocation3], %s254
        // Predicated region
        $region37: #{tpu_custom_call.1} parent=35 // pred_check
          %p256 = pneg %p64
        $region38: #{tpu_custom_call.1} parent=35 // pred_check_branch
          %258 = sbr.rel (%p256) target = $region40
        $region39: #{tpu_custom_call.1} parent=35 // pred_region
          %260 = dma.done %s252, 4096
        $region40: #{tpu_custom_call.1} parent=35 // pred_fallthru
          _
        // Predicated region
        $region41: #{tpu_custom_call.1} parent=35 // pred_check
          %p261 = pneg %p92
        $region42: #{tpu_custom_call.1} parent=35 // pred_check_branch
          %263 = sbr.rel (%p261) target = $region44
        $region43: #{tpu_custom_call.1} parent=35 // pred_region
          %265 = dma.done [#allocation7], 2048
        $region44: #{tpu_custom_call.1} parent=35 // pred_fallthru
          _
        %s266 = sand.u32 %s51, 1
        %s267 = scalar_lea.sflag [#allocation4], %s266
        %s268 = sand.u32 %s51, 1
        %s269 = smul.addr %s268, 256
        %s270 = scalar_lea.vmem [#allocation3], %s269
        %p271 = pneg %p64
        %p272 = pneg %p61
        %p273 = pneg %p92
        %p274 = pneg %p89
        %p275 = scmp.lt.s32.totalorder %s28, 0
        %s276 = scalar_select %p275, %s28, 0
        %s277 = scalar_lea.vmem %s2, %s276
        %p278 = pneg %p118
        %p279 = pneg %p115
        %p280 = scmp.lt.s32.totalorder %s28, 0
        %s281 = scalar_select %p280, %s28, 0
        %s282 = scalar_lea.vmem %s3, %s281
        %p283 = pneg %p144
        %p284 = pneg %p141
        %p285 = pneg %p172
        %p286 = pneg %p169
        %s287 = sand.u32 %s159, 1
        %s288 = scalar_lea.sflag [#allocation5], %s287
        %s289 = sand.u32 %s159, 1
        %s290 = smul.addr %s289, 256
        %s291 = scalar_lea.vmem [#allocation8], %s290
        %s292 = smul.u32 32, %s27
        %s293 = smul.u32 16, %s29
        %p294 = scmp.lt.s32.totalorder %s28, 0
        %s295 = scalar_select %p294, %s28, 0
        %s296 = scalar_lea.vmem %s2, %s295
        %p297 = scmp.lt.s32.totalorder %s28, 0
        %s298 = scalar_select %p297, %s28, 0
        %s299 = scalar_lea.vmem %s3, %s298
        %s300 = smul.u32 32, %s27
        %p301 = scmp.eq.s32.totalorder %s29, 0
        // Predicated region
        $region45: #{tpu_custom_call.1} parent=35 // pred_check
          %p302 = pneg %p301
        $region46: #{tpu_custom_call.1} parent=35 // pred_check_branch
          %304 = sbr.rel (%p302) target = $region48
        $region47: #{tpu_custom_call.1} parent=35 // pred_region
          %305 = vst [vmem:[#allocation2] sm:$0xff] 0.0
          %306 = vst [vmem:[#allocation2 + $0x8] sm:$0xff] 0.0
          %307 = vst [vmem:[#allocation2 + $0x10] sm:$0xff] 0.0
          %308 = vst [vmem:[#allocation2 + $0x18] sm:$0xff] 0.0
          %309 = vst [vmem:[#allocation2 + $0x20] sm:$0xff] 0.0
          %310 = vst [vmem:[#allocation2 + $0x28] sm:$0xff] 0.0
          %311 = vst [vmem:[#allocation2 + $0x30] sm:$0xff] 0.0
          %312 = vst [vmem:[#allocation2 + $0x38] sm:$0xff] 0.0
          %313 = vst [vmem:[#allocation2 + $0x40] sm:$0xff] 0.0
          %314 = vst [vmem:[#allocation2 + $0x48] sm:$0xff] 0.0
          %315 = vst [vmem:[#allocation2 + $0x50] sm:$0xff] 0.0
          %316 = vst [vmem:[#allocation2 + $0x58] sm:$0xff] 0.0
          %317 = vst [vmem:[#allocation2 + $0x60] sm:$0xff] 0.0
          %318 = vst [vmem:[#allocation2 + $0x68] sm:$0xff] 0.0
          %319 = vst [vmem:[#allocation2 + $0x70] sm:$0xff] 0.0
          %320 = vst [vmem:[#allocation2 + $0x78] sm:$0xff] 0.0
          %321 = vst [vmem:[#allocation2 + $0x80] sm:$0xff] 0.0
          %322 = vst [vmem:[#allocation2 + $0x88] sm:$0xff] 0.0
          %323 = vst [vmem:[#allocation2 + $0x90] sm:$0xff] 0.0
          %324 = vst [vmem:[#allocation2 + $0x98] sm:$0xff] 0.0
          %325 = vst [vmem:[#allocation2 + $0xa0] sm:$0xff] 0.0
          %326 = vst [vmem:[#allocation2 + $0xa8] sm:$0xff] 0.0
          %327 = vst [vmem:[#allocation2 + $0xb0] sm:$0xff] 0.0
          %328 = vst [vmem:[#allocation2 + $0xb8] sm:$0xff] 0.0
          %329 = vst [vmem:[#allocation2 + $0xc0] sm:$0xff] 0.0
          %330 = vst [vmem:[#allocation2 + $0xc8] sm:$0xff] 0.0
          %331 = vst [vmem:[#allocation2 + $0xd0] sm:$0xff] 0.0
          %332 = vst [vmem:[#allocation2 + $0xd8] sm:$0xff] 0.0
          %333 = vst [vmem:[#allocation2 + $0xe0] sm:$0xff] 0.0
          %334 = vst [vmem:[#allocation2 + $0xe8] sm:$0xff] 0.0
          %335 = vst [vmem:[#allocation2 + $0xf0] sm:$0xff] 0.0
          %336 = vst [vmem:[#allocation2 + $0xf8] sm:$0xff] 0.0
        $region48: #{tpu_custom_call.1} parent=35 // pred_fallthru
          _
        %v337 = vld [vmem:[#allocation2] sm:$0xff]
        %v338 = vld [vmem:[#allocation2 + $0x8] sm:$0xff]
        %v339 = vld [vmem:[#allocation2 + $0x10] sm:$0xff]
        %v340 = vld [vmem:[#allocation2 + $0x18] sm:$0xff]
        %v341 = vld [vmem:[#allocation2 + $0x20] sm:$0xff]
        %v342 = vld [vmem:[#allocation2 + $0x28] sm:$0xff]
        %v343 = vld [vmem:[#allocation2 + $0x30] sm:$0xff]
        %v344 = vld [vmem:[#allocation2 + $0x38] sm:$0xff]
        %v345 = vld [vmem:[#allocation2 + $0x40] sm:$0xff]
        %v346 = vld [vmem:[#allocation2 + $0x48] sm:$0xff]
        %v347 = vld [vmem:[#allocation2 + $0x50] sm:$0xff]
        %v348 = vld [vmem:[#allocation2 + $0x58] sm:$0xff]
        %v349 = vld [vmem:[#allocation2 + $0x60] sm:$0xff]
        %v350 = vld [vmem:[#allocation2 + $0x68] sm:$0xff]
        %v351 = vld [vmem:[#allocation2 + $0x70] sm:$0xff]
        %v352 = vld [vmem:[#allocation2 + $0x78] sm:$0xff]
        %v353 = vld [vmem:[#allocation2 + $0x80] sm:$0xff]
        %v354 = vld [vmem:[#allocation2 + $0x88] sm:$0xff]
        %v355 = vld [vmem:[#allocation2 + $0x90] sm:$0xff]
        %v356 = vld [vmem:[#allocation2 + $0x98] sm:$0xff]
        %v357 = vld [vmem:[#allocation2 + $0xa0] sm:$0xff]
        %v358 = vld [vmem:[#allocation2 + $0xa8] sm:$0xff]
        %v359 = vld [vmem:[#allocation2 + $0xb0] sm:$0xff]
        %v360 = vld [vmem:[#allocation2 + $0xb8] sm:$0xff]
        %v361 = vld [vmem:[#allocation2 + $0xc0] sm:$0xff]
        %v362 = vld [vmem:[#allocation2 + $0xc8] sm:$0xff]
        %v363 = vld [vmem:[#allocation2 + $0xd0] sm:$0xff]
        %v364 = vld [vmem:[#allocation2 + $0xd8] sm:$0xff]
        %v365 = vld [vmem:[#allocation2 + $0xe0] sm:$0xff]
        %v366 = vld [vmem:[#allocation2 + $0xe8] sm:$0xff]
        %v367 = vld [vmem:[#allocation2 + $0xf0] sm:$0xff]
        %v368 = vld [vmem:[#allocation2 + $0xf8] sm:$0xff]
        %v369 = vld [vmem:[%s255] sm:$0xff]
        %v370 = vld [vmem:[%s255 + $0x8] sm:$0xff]
        %v371 = vld [vmem:[%s255 + $0x10] sm:$0xff]
        %v372 = vld [vmem:[%s255 + $0x18] sm:$0xff]
        %v373 = vld [vmem:[%s255 + $0x20] sm:$0xff]
        %v374 = vld [vmem:[%s255 + $0x28] sm:$0xff]
        %v375 = vld [vmem:[%s255 + $0x30] sm:$0xff]
        %v376 = vld [vmem:[%s255 + $0x38] sm:$0xff]
        %v377 = vld [vmem:[%s255 + $0x40] sm:$0xff]
        %v378 = vld [vmem:[%s255 + $0x48] sm:$0xff]
        %v379 = vld [vmem:[%s255 + $0x50] sm:$0xff]
        %v380 = vld [vmem:[%s255 + $0x58] sm:$0xff]
        %v381 = vld [vmem:[%s255 + $0x60] sm:$0xff]
        %v382 = vld [vmem:[%s255 + $0x68] sm:$0xff]
        %v383 = vld [vmem:[%s255 + $0x70] sm:$0xff]
        %v384 = vld [vmem:[%s255 + $0x78] sm:$0xff]
        %v385 = vld [vmem:[%s255 + $0x80] sm:$0xff]
        %v386 = vld [vmem:[%s255 + $0x88] sm:$0xff]
        %v387 = vld [vmem:[%s255 + $0x90] sm:$0xff]
        %v388 = vld [vmem:[%s255 + $0x98] sm:$0xff]
        %v389 = vld [vmem:[%s255 + $0xa0] sm:$0xff]
        %v390 = vld [vmem:[%s255 + $0xa8] sm:$0xff]
        %v391 = vld [vmem:[%s255 + $0xb0] sm:$0xff]
        %v392 = vld [vmem:[%s255 + $0xb8] sm:$0xff]
        %v393 = vld [vmem:[%s255 + $0xc0] sm:$0xff]
        %v394 = vld [vmem:[%s255 + $0xc8] sm:$0xff]
        %v395 = vld [vmem:[%s255 + $0xd0] sm:$0xff]
        %v396 = vld [vmem:[%s255 + $0xd8] sm:$0xff]
        %v397 = vld [vmem:[%s255 + $0xe0] sm:$0xff]
        %v398 = vld [vmem:[%s255 + $0xe8] sm:$0xff]
        %v399 = vld [vmem:[%s255 + $0xf0] sm:$0xff]
        %v400 = vld [vmem:[%s255 + $0xf8] sm:$0xff]
        %v401 = vld [vmem:[#allocation6] sm:$0xff]
        %v402 = vld [vmem:[#allocation6 + $0x8] sm:$0xff]
        %v403 = vld [vmem:[#allocation6 + $0x10] sm:$0xff]
        %v404 = vld [vmem:[#allocation6 + $0x18] sm:$0xff]
        %v405 = vld [vmem:[#allocation6 + $0x20] sm:$0xff]
        %v406 = vld [vmem:[#allocation6 + $0x28] sm:$0xff]
        %v407 = vld [vmem:[#allocation6 + $0x30] sm:$0xff]
        %v408 = vld [vmem:[#allocation6 + $0x38] sm:$0xff]
        %v409 = vld [vmem:[#allocation6 + $0x40] sm:$0xff]
        %v410 = vld [vmem:[#allocation6 + $0x48] sm:$0xff]
        %v411 = vld [vmem:[#allocation6 + $0x50] sm:$0xff]
        %v412 = vld [vmem:[#allocation6 + $0x58] sm:$0xff]
        %v413 = vld [vmem:[#allocation6 + $0x60] sm:$0xff]
        %v414 = vld [vmem:[#allocation6 + $0x68] sm:$0xff]
        %v415 = vld [vmem:[#allocation6 + $0x70] sm:$0xff]
        %v416 = vld [vmem:[#allocation6 + $0x78] sm:$0xff]
        %417 = vmatpush.msra.mxu0 %v416
        %418 = vmatpush.msra.mxu0 %v415
        %419 = vmatpush.msra.mxu0 %v414
        %420 = vmatpush.msra.mxu0 %v413
        %421 = vmatpush.msra.mxu0 %v412
        %422 = vmatpush.msra.mxu0 %v411
        %423 = vmatpush.msra.mxu0 %v410
        %424 = vmatpush.msra.mxu0 %v409
        %425 = vmatpush.msra.mxu0 %v408
        %426 = vmatpush.msra.mxu0 %v407
        %427 = vmatpush.msra.mxu0 %v406
        %428 = vmatpush.msra.mxu0 %v405
        %429 = vmatpush.msra.mxu0 %v404
        %430 = vmatpush.msra.mxu0 %v403
        %431 = vmatpush.msra.mxu0 %v402
        %432 = vmatpush.msra.mxu0 %v401
        %433 = vmatmul.f32.gmra.mxu0 %v369
        %v434 = vpop.f32.mrf.mxu0
        %v435 = vadd.f32 0.0, %v434
        %436 = vmatmul.f32.gmra.mxu0 %v370
        %v437 = vpop.f32.mrf.mxu0
        %v438 = vadd.f32 0.0, %v437
        %439 = vmatmul.f32.gmra.mxu0 %v371
        %v440 = vpop.f32.mrf.mxu0
        %v441 = vadd.f32 0.0, %v440
        %442 = vmatmul.f32.gmra.mxu0 %v372
        %v443 = vpop.f32.mrf.mxu0
        %v444 = vadd.f32 0.0, %v443
        %445 = vmatmul.f32.gmra.mxu0 %v373
        %v446 = vpop.f32.mrf.mxu0
        %v447 = vadd.f32 0.0, %v446
        %448 = vmatmul.f32.gmra.mxu0 %v374
        %v449 = vpop.f32.mrf.mxu0
        %v450 = vadd.f32 0.0, %v449
        %451 = vmatmul.f32.gmra.mxu0 %v375
        %v452 = vpop.f32.mrf.mxu0
        %v453 = vadd.f32 0.0, %v452
        %454 = vmatmul.f32.gmra.mxu0 %v376
        %v455 = vpop.f32.mrf.mxu0
        %v456 = vadd.f32 0.0, %v455
        %457 = vmatmul.f32.gmra.mxu0 %v377
        %v458 = vpop.f32.mrf.mxu0
        %v459 = vadd.f32 0.0, %v458
        %460 = vmatmul.f32.gmra.mxu0 %v378
        %v461 = vpop.f32.mrf.mxu0
        %v462 = vadd.f32 0.0, %v461
        %463 = vmatmul.f32.gmra.mxu0 %v379
        %v464 = vpop.f32.mrf.mxu0
        %v465 = vadd.f32 0.0, %v464
        %466 = vmatmul.f32.gmra.mxu0 %v380
        %v467 = vpop.f32.mrf.mxu0
        %v468 = vadd.f32 0.0, %v467
        %469 = vmatmul.f32.gmra.mxu0 %v381
        %v470 = vpop.f32.mrf.mxu0
        %v471 = vadd.f32 0.0, %v470
        %472 = vmatmul.f32.gmra.mxu0 %v382
        %v473 = vpop.f32.mrf.mxu0
        %v474 = vadd.f32 0.0, %v473
        %475 = vmatmul.f32.gmra.mxu0 %v383
        %v476 = vpop.f32.mrf.mxu0
        %v477 = vadd.f32 0.0, %v476
        %478 = vmatmul.f32.gmra.mxu0 %v384
        %v479 = vpop.f32.mrf.mxu0
        %v480 = vadd.f32 0.0, %v479
        %481 = vmatmul.f32.gmra.mxu0 %v385
        %v482 = vpop.f32.mrf.mxu0
        %v483 = vadd.f32 0.0, %v482
        %484 = vmatmul.f32.gmra.mxu0 %v386
        %v485 = vpop.f32.mrf.mxu0
        %v486 = vadd.f32 0.0, %v485
        %487 = vmatmul.f32.gmra.mxu0 %v387
        %v488 = vpop.f32.mrf.mxu0
        %v489 = vadd.f32 0.0, %v488
        %490 = vmatmul.f32.gmra.mxu0 %v388
        %v491 = vpop.f32.mrf.mxu0
        %v492 = vadd.f32 0.0, %v491
        %493 = vmatmul.f32.gmra.mxu0 %v389
        %v494 = vpop.f32.mrf.mxu0
        %v495 = vadd.f32 0.0, %v494
        %496 = vmatmul.f32.gmra.mxu0 %v390
        %v497 = vpop.f32.mrf.mxu0
        %v498 = vadd.f32 0.0, %v497
        %499 = vmatmul.f32.gmra.mxu0 %v391
        %v500 = vpop.f32.mrf.mxu0
        %v501 = vadd.f32 0.0, %v500
        %502 = vmatmul.f32.gmra.mxu0 %v392
        %v503 = vpop.f32.mrf.mxu0
        %v504 = vadd.f32 0.0, %v503
        %505 = vmatmul.f32.gmra.mxu0 %v393
        %v506 = vpop.f32.mrf.mxu0
        %v507 = vadd.f32 0.0, %v506
        %508 = vmatmul.f32.gmra.mxu0 %v394
        %v509 = vpop.f32.mrf.mxu0
        %v510 = vadd.f32 0.0, %v509
        %511 = vmatmul.f32.gmra.mxu0 %v395
        %v512 = vpop.f32.mrf.mxu0
        %v513 = vadd.f32 0.0, %v512
        %514 = vmatmul.f32.gmra.mxu0 %v396
        %v515 = vpop.f32.mrf.mxu0
        %v516 = vadd.f32 0.0, %v515
        %517 = vmatmul.f32.gmra.mxu0 %v397
        %v518 = vpop.f32.mrf.mxu0
        %v519 = vadd.f32 0.0, %v518
        %520 = vmatmul.f32.gmra.mxu0 %v398
        %v521 = vpop.f32.mrf.mxu0
        %v522 = vadd.f32 0.0, %v521
        %523 = vmatmul.f32.gmra.mxu0 %v399
        %v524 = vpop.f32.mrf.mxu0
        %v525 = vadd.f32 0.0, %v524
        %526 = vmatmul.f32.gmra.mxu0 %v400
        %v527 = vpop.f32.mrf.mxu0
        %v528 = vadd.f32 0.0, %v527
        %529 = vdwg.mxu0
        %v530 = vadd.f32 %v337, %v435
        %v531 = vadd.f32 %v338, %v438
        %v532 = vadd.f32 %v339, %v441
        %v533 = vadd.f32 %v340, %v444
        %v534 = vadd.f32 %v341, %v447
        %v535 = vadd.f32 %v342, %v450
        %v536 = vadd.f32 %v343, %v453
        %v537 = vadd.f32 %v344, %v456
        %v538 = vadd.f32 %v345, %v459
        %v539 = vadd.f32 %v346, %v462
        %v540 = vadd.f32 %v347, %v465
        %v541 = vadd.f32 %v348, %v468
        %v542 = vadd.f32 %v349, %v471
        %v543 = vadd.f32 %v350, %v474
        %v544 = vadd.f32 %v351, %v477
        %v545 = vadd.f32 %v352, %v480
        %v546 = vadd.f32 %v353, %v483
        %v547 = vadd.f32 %v354, %v486
        %v548 = vadd.f32 %v355, %v489
        %v549 = vadd.f32 %v356, %v492
        %v550 = vadd.f32 %v357, %v495
        %v551 = vadd.f32 %v358, %v498
        %v552 = vadd.f32 %v359, %v501
        %v553 = vadd.f32 %v360, %v504
        %v554 = vadd.f32 %v361, %v507
        %v555 = vadd.f32 %v362, %v510
        %v556 = vadd.f32 %v363, %v513
        %v557 = vadd.f32 %v364, %v516
        %v558 = vadd.f32 %v365, %v519
        %v559 = vadd.f32 %v366, %v522
        %v560 = vadd.f32 %v367, %v525
        %v561 = vadd.f32 %v368, %v528
        %562 = vst [vmem:[#allocation2] sm:$0xff] %v530
        %563 = vst [vmem:[#allocation2 + $0x8] sm:$0xff] %v531
        %564 = vst [vmem:[#allocation2 + $0x10] sm:$0xff] %v532
        %565 = vst [vmem:[#allocation2 + $0x18] sm:$0xff] %v533
        %566 = vst [vmem:[#allocation2 + $0x20] sm:$0xff] %v534
        %567 = vst [vmem:[#allocation2 + $0x28] sm:$0xff] %v535
        %568 = vst [vmem:[#allocation2 + $0x30] sm:$0xff] %v536
        %569 = vst [vmem:[#allocation2 + $0x38] sm:$0xff] %v537
        %570 = vst [vmem:[#allocation2 + $0x40] sm:$0xff] %v538
        %571 = vst [vmem:[#allocation2 + $0x48] sm:$0xff] %v539
        %572 = vst [vmem:[#allocation2 + $0x50] sm:$0xff] %v540
        %573 = vst [vmem:[#allocation2 + $0x58] sm:$0xff] %v541
        %574 = vst [vmem:[#allocation2 + $0x60] sm:$0xff] %v542
        %575 = vst [vmem:[#allocation2 + $0x68] sm:$0xff] %v543
        %576 = vst [vmem:[#allocation2 + $0x70] sm:$0xff] %v544
        %577 = vst [vmem:[#allocation2 + $0x78] sm:$0xff] %v545
        %578 = vst [vmem:[#allocation2 + $0x80] sm:$0xff] %v546
        %579 = vst [vmem:[#allocation2 + $0x88] sm:$0xff] %v547
        %580 = vst [vmem:[#allocation2 + $0x90] sm:$0xff] %v548
        %581 = vst [vmem:[#allocation2 + $0x98] sm:$0xff] %v549
        %582 = vst [vmem:[#allocation2 + $0xa0] sm:$0xff] %v550
        %583 = vst [vmem:[#allocation2 + $0xa8] sm:$0xff] %v551
        %584 = vst [vmem:[#allocation2 + $0xb0] sm:$0xff] %v552
        %585 = vst [vmem:[#allocation2 + $0xb8] sm:$0xff] %v553
        %586 = vst [vmem:[#allocation2 + $0xc0] sm:$0xff] %v554
        %587 = vst [vmem:[#allocation2 + $0xc8] sm:$0xff] %v555
        %588 = vst [vmem:[#allocation2 + $0xd0] sm:$0xff] %v556
        %589 = vst [vmem:[#allocation2 + $0xd8] sm:$0xff] %v557
        %590 = vst [vmem:[#allocation2 + $0xe0] sm:$0xff] %v558
        %591 = vst [vmem:[#allocation2 + $0xe8] sm:$0xff] %v559
        %592 = vst [vmem:[#allocation2 + $0xf0] sm:$0xff] %v560
        %593 = vst [vmem:[#allocation2 + $0xf8] sm:$0xff] %v561
        // Predicated region
        $region49: #{tpu_custom_call.1} parent=35 // pred_check
          %p594 = pneg %p301
        $region50: #{tpu_custom_call.1} parent=35 // pred_check_branch
          %596 = sbr.rel (%p594) target = $region52
        $region51: #{tpu_custom_call.1} parent=35 // pred_region
          %v597 = vld [vmem:[#allocation2] sm:$0xff]
          %v598 = vld [vmem:[#allocation2 + $0x8] sm:$0xff]
          %v599 = vld [vmem:[#allocation2 + $0x10] sm:$0xff]
          %v600 = vld [vmem:[#allocation2 + $0x18] sm:$0xff]
          %v601 = vld [vmem:[#allocation2 + $0x20] sm:$0xff]
          %v602 = vld [vmem:[#allocation2 + $0x28] sm:$0xff]
          %v603 = vld [vmem:[#allocation2 + $0x30] sm:$0xff]
          %v604 = vld [vmem:[#allocation2 + $0x38] sm:$0xff]
          %v605 = vld [vmem:[#allocation2 + $0x40] sm:$0xff]
          %v606 = vld [vmem:[#allocation2 + $0x48] sm:$0xff]
          %v607 = vld [vmem:[#allocation2 + $0x50] sm:$0xff]
          %v608 = vld [vmem:[#allocation2 + $0x58] sm:$0xff]
          %v609 = vld [vmem:[#allocation2 + $0x60] sm:$0xff]
          %v610 = vld [vmem:[#allocation2 + $0x68] sm:$0xff]
          %v611 = vld [vmem:[#allocation2 + $0x70] sm:$0xff]
          %v612 = vld [vmem:[#allocation2 + $0x78] sm:$0xff]
          %v613 = vld [vmem:[#allocation2 + $0x80] sm:$0xff]
          %v614 = vld [vmem:[#allocation2 + $0x88] sm:$0xff]
          %v615 = vld [vmem:[#allocation2 + $0x90] sm:$0xff]
          %v616 = vld [vmem:[#allocation2 + $0x98] sm:$0xff]
          %v617 = vld [vmem:[#allocation2 + $0xa0] sm:$0xff]
          %v618 = vld [vmem:[#allocation2 + $0xa8] sm:$0xff]
          %v619 = vld [vmem:[#allocation2 + $0xb0] sm:$0xff]
          %v620 = vld [vmem:[#allocation2 + $0xb8] sm:$0xff]
          %v621 = vld [vmem:[#allocation2 + $0xc0] sm:$0xff]
          %v622 = vld [vmem:[#allocation2 + $0xc8] sm:$0xff]
          %v623 = vld [vmem:[#allocation2 + $0xd0] sm:$0xff]
          %v624 = vld [vmem:[#allocation2 + $0xd8] sm:$0xff]
          %v625 = vld [vmem:[#allocation2 + $0xe0] sm:$0xff]
          %v626 = vld [vmem:[#allocation2 + $0xe8] sm:$0xff]
          %v627 = vld [vmem:[#allocation2 + $0xf0] sm:$0xff]
          %v628 = vld [vmem:[#allocation2 + $0xf8] sm:$0xff]
          %v629 = vld [vmem:[%s296] sm:$0x1]
          %v631 = vperm.slane %v629, 0
          %v633 = vmul.f32 %v597, %v631
          %v634 = vmul.f32 %v598, %v631
          %v635 = vmul.f32 %v599, %v631
          %v636 = vmul.f32 %v600, %v631
          %v637 = vmul.f32 %v601, %v631
          %v638 = vmul.f32 %v602, %v631
          %v639 = vmul.f32 %v603, %v631
          %v640 = vmul.f32 %v604, %v631
          %v641 = vmul.f32 %v605, %v631
          %v642 = vmul.f32 %v606, %v631
          %v643 = vmul.f32 %v607, %v631
          %v644 = vmul.f32 %v608, %v631
          %v645 = vmul.f32 %v609, %v631
          %v646 = vmul.f32 %v610, %v631
          %v647 = vmul.f32 %v611, %v631
          %v648 = vmul.f32 %v612, %v631
          %v649 = vmul.f32 %v613, %v631
          %v650 = vmul.f32 %v614, %v631
          %v651 = vmul.f32 %v615, %v631
          %v652 = vmul.f32 %v616, %v631
          %v653 = vmul.f32 %v617, %v631
          %v654 = vmul.f32 %v618, %v631
          %v655 = vmul.f32 %v619, %v631
          %v656 = vmul.f32 %v620, %v631
          %v657 = vmul.f32 %v621, %v631
          %v658 = vmul.f32 %v622, %v631
          %v659 = vmul.f32 %v623, %v631
          %v660 = vmul.f32 %v624, %v631
          %v661 = vmul.f32 %v625, %v631
          %v662 = vmul.f32 %v626, %v631
          %v663 = vmul.f32 %v627, %v631
          %v664 = vmul.f32 %v628, %v631
          %v665 = vld [vmem:[%s299] sm:$0x1]
          %v667 = vperm.slane %v665, 0
          %v669 = vadd.f32 %v633, %v667
          %v670 = vadd.f32 %v634, %v667
          %v671 = vadd.f32 %v635, %v667
          %v672 = vadd.f32 %v636, %v667
          %v673 = vadd.f32 %v637, %v667
          %v674 = vadd.f32 %v638, %v667
          %v675 = vadd.f32 %v639, %v667
          %v676 = vadd.f32 %v640, %v667
          %v677 = vadd.f32 %v641, %v667
          %v678 = vadd.f32 %v642, %v667
          %v679 = vadd.f32 %v643, %v667
          %v680 = vadd.f32 %v644, %v667
          %v681 = vadd.f32 %v645, %v667
          %v682 = vadd.f32 %v646, %v667
          %v683 = vadd.f32 %v647, %v667
          %v684 = vadd.f32 %v648, %v667
          %v685 = vadd.f32 %v649, %v667
          %v686 = vadd.f32 %v650, %v667
          %v687 = vadd.f32 %v651, %v667
          %v688 = vadd.f32 %v652, %v667
          %v689 = vadd.f32 %v653, %v667
          %v690 = vadd.f32 %v654, %v667
          %v691 = vadd.f32 %v655, %v667
          %v692 = vadd.f32 %v656, %v667
          %v693 = vadd.f32 %v657, %v667
          %v694 = vadd.f32 %v658, %v667
          %v695 = vadd.f32 %v659, %v667
          %v696 = vadd.f32 %v660, %v667
          %v697 = vadd.f32 %v661, %v667
          %v698 = vadd.f32 %v662, %v667
          %v699 = vadd.f32 %v663, %v667
          %v700 = vadd.f32 %v664, %v667
          %v701 = vmax.f32 %v669, 0.0
          %v702 = vmax.f32 %v670, 0.0
          %v703 = vmax.f32 %v671, 0.0
          %v704 = vmax.f32 %v672, 0.0
          %v705 = vmax.f32 %v673, 0.0
          %v706 = vmax.f32 %v674, 0.0
          %v707 = vmax.f32 %v675, 0.0
          %v708 = vmax.f32 %v676, 0.0
          %v709 = vmax.f32 %v677, 0.0
          %v710 = vmax.f32 %v678, 0.0
          %v711 = vmax.f32 %v679, 0.0
          %v712 = vmax.f32 %v680, 0.0
          %v713 = vmax.f32 %v681, 0.0
          %v714 = vmax.f32 %v682, 0.0
          %v715 = vmax.f32 %v683, 0.0
          %v716 = vmax.f32 %v684, 0.0
          %v717 = vmax.f32 %v685, 0.0
          %v718 = vmax.f32 %v686, 0.0
          %v719 = vmax.f32 %v687, 0.0
          %v720 = vmax.f32 %v688, 0.0
          %v721 = vmax.f32 %v689, 0.0
          %v722 = vmax.f32 %v690, 0.0
          %v723 = vmax.f32 %v691, 0.0
          %v724 = vmax.f32 %v692, 0.0
          %v725 = vmax.f32 %v693, 0.0
          %v726 = vmax.f32 %v694, 0.0
          %v727 = vmax.f32 %v695, 0.0
          %v728 = vmax.f32 %v696, 0.0
          %v729 = vmax.f32 %v697, 0.0
          %v730 = vmax.f32 %v698, 0.0
          %v731 = vmax.f32 %v699, 0.0
          %v732 = vmax.f32 %v700, 0.0
          %733 = vst [vmem:[%s291] sm:$0xff] %v701
          %734 = vst [vmem:[%s291 + $0x8] sm:$0xff] %v702
          %735 = vst [vmem:[%s291 + $0x10] sm:$0xff] %v703
          %736 = vst [vmem:[%s291 + $0x18] sm:$0xff] %v704
          %737 = vst [vmem:[%s291 + $0x20] sm:$0xff] %v705
          %738 = vst [vmem:[%s291 + $0x28] sm:$0xff] %v706
          %739 = vst [vmem:[%s291 + $0x30] sm:$0xff] %v707
          %740 = vst [vmem:[%s291 + $0x38] sm:$0xff] %v708
          %741 = vst [vmem:[%s291 + $0x40] sm:$0xff] %v709
          %742 = vst [vmem:[%s291 + $0x48] sm:$0xff] %v710
          %743 = vst [vmem:[%s291 + $0x50] sm:$0xff] %v711
          %744 = vst [vmem:[%s291 + $0x58] sm:$0xff] %v712
          %745 = vst [vmem:[%s291 + $0x60] sm:$0xff] %v713
          %746 = vst [vmem:[%s291 + $0x68] sm:$0xff] %v714
          %747 = vst [vmem:[%s291 + $0x70] sm:$0xff] %v715
          %748 = vst [vmem:[%s291 + $0x78] sm:$0xff] %v716
          %749 = vst [vmem:[%s291 + $0x80] sm:$0xff] %v717
          %750 = vst [vmem:[%s291 + $0x88] sm:$0xff] %v718
          %751 = vst [vmem:[%s291 + $0x90] sm:$0xff] %v719
          %752 = vst [vmem:[%s291 + $0x98] sm:$0xff] %v720
          %753 = vst [vmem:[%s291 + $0xa0] sm:$0xff] %v721
          %754 = vst [vmem:[%s291 + $0xa8] sm:$0xff] %v722
          %755 = vst [vmem:[%s291 + $0xb0] sm:$0xff] %v723
          %756 = vst [vmem:[%s291 + $0xb8] sm:$0xff] %v724
          %757 = vst [vmem:[%s291 + $0xc0] sm:$0xff] %v725
          %758 = vst [vmem:[%s291 + $0xc8] sm:$0xff] %v726
          %759 = vst [vmem:[%s291 + $0xd0] sm:$0xff] %v727
          %760 = vst [vmem:[%s291 + $0xd8] sm:$0xff] %v728
          %761 = vst [vmem:[%s291 + $0xe0] sm:$0xff] %v729
          %762 = vst [vmem:[%s291 + $0xe8] sm:$0xff] %v730
          %763 = vst [vmem:[%s291 + $0xf0] sm:$0xff] %v731
          %764 = vst [vmem:[%s291 + $0xf8] sm:$0xff] %v732
        $region52: #{tpu_custom_call.1} parent=35 // pred_fallthru
          _
        %s765 = sand.u32 %s159, 1
        %s766 = scalar_lea.sflag [#allocation5], %s765
        %s767 = sand.u32 %s159, 1
        %s768 = smul.addr %s767, 256
        %s769 = scalar_lea.vmem [#allocation8], %s768
        // Predicated region
        $region53: #{tpu_custom_call.1} parent=35 // pred_check
          %p770 = pneg %p169
        $region54: #{tpu_custom_call.1} parent=35 // pred_check_branch
          %772 = sbr.rel (%p770) target = $region56
        $region55: #{tpu_custom_call.1} parent=35 // pred_region
          %s773 = smul.u32 32, %s27
          %775 = vsyncadd %s766, 0
          %s776 = sadd.s32 %s28, %s773
          %s777 = smul.addr %s776, 8
          %s778 = scalar_lea.hbm %s4, %s777
          %s779 = sshll.u32 %s769, 4
          %s780 = int_to_ptr.vmem [resolvable:$true] %s779
          %s781 = sshll.u32 %s778, 4
          %s782 = int_to_ptr.hbm [resolvable:$true] %s781
          %787 = dma.vmem_to_hbm [thread:$0]  %s780, 4096, %s782, %s766, 128, 128, 8
        $region56: #{tpu_custom_call.1} parent=35 // pred_fallthru
          _
      $region36: #{tpu_custom_call.1} parent=5 // pred_fallthru
        _
      %p788 = scmp.le.s32.totalorder 2, %s17
      // Predicated region
      $region57: #{tpu_custom_call.1} parent=5 // pred_check
        %p789 = pneg %p788
      $region58: #{tpu_custom_call.1} parent=5 // pred_check_branch
        %791 = sbr.rel (%p789) target = $region60
      $region59: #{tpu_custom_call.1} parent=5 // pred_region
        %s792 = ssub.s32 %s17, 2
        // Predicated region
        $region61: #{tpu_custom_call.1} parent=59 // pred_check
          %p793 = pneg %p175
        $region62: #{tpu_custom_call.1} parent=59 // pred_check_branch
          %795 = sbr.rel (%p793) target = $region64
        $region63: #{tpu_custom_call.1} parent=59 // pred_region
          %s796 = sand.u32 %s160, 1
          %s797 = scalar_lea.sflag [#allocation5], %s796
          %s798 = sand.u32 %s160, 1
          %s799 = smul.addr %s798, 256
          %s800 = scalar_lea.vmem [#allocation8], %s799
          %802 = dma.done %s797, 4096
        $region64: #{tpu_custom_call.1} parent=59 // pred_fallthru
          _
      $region60: #{tpu_custom_call.1} parent=5 // pred_fallthru
        _
    $region6: #{tpu_custom_call.1} parent=1 // loop_footer
      %s21 = sadd.s32 1, %s17
    $region7: #{tpu_custom_call.1} parent=1 // loop_footer_branch
      %16 = sbr.rel target = $region3
    $region8: #{tpu_custom_call.1} parent=1 // loop_exit
      _
    %803 = vsyncpa [#allocation4], 1
    %s804 = scalar_lea.sflag [#allocation4], 1
    %805 = vsyncpa %s804, 1
    %806 = vsyncpa [#allocation7], 1
    %807 = vsyncpa [#allocation5], 1
    %s808 = scalar_lea.sflag [#allocation5], 1
    %809 = vsyncpa %s808, 1

</llo_original>
